<compile_context>
chip_gen: v7x
topology: tpu7x:2x2x1
jax: 0.10.0
libtpu: 0.0.40
codegen_flags: <defaults>
</compile_context>

<pallas_src>
import jax
import jax.numpy as jnp
import numpy as np
from jax import lax
from jax.experimental import pallas as pl
from jax.experimental.pallas import tpu as pltpu


_ROLL_LIKE_NUMPY = None


def _roll_like_numpy() -> bool:
    """Pin down pltpu.roll's rotation-direction convention with a tiny probe.

    The kernel needs shifted[p] = a[(p + off) % n]. If pltpu.roll matches
    jnp.roll (roll(a, s)[p] = a[p - s]) we pass shift = (-off) % n, otherwise
    off % n. Probing once makes the kernel robust across JAX versions.
    """
    global _ROLL_LIKE_NUMPY
    if _ROLL_LIKE_NUMPY is None:
        def probe(x_ref, o_ref):
            o_ref[...] = pltpu.roll(x_ref[...], 1, 1)

        x = jnp.arange(8 * 128, dtype=jnp.float32).reshape(8, 128)
        y = pl.pallas_call(
            probe, out_shape=jax.ShapeDtypeStruct((8, 128), jnp.float32))(x)
        _ROLL_LIKE_NUMPY = bool(float(np.asarray(y)[0, 0]) == 127.0)
    return _ROLL_LIKE_NUMPY


def vae_encoder_forward(x_nchw, params):
    """Fused forward for 3x (Conv2d(3x3, stride=1, pad=1) + ReLU), NCHW in/out."""
    N, C0, H, W = x_nchw.shape
    HW = H * W
    (w1, b1), (w2, b2), (w3, b3) = params
    C1, C2, C3 = w1.shape[0], w2.shape[0], w3.shape[0]

    taps = tuple((dy, dx) for dy in (-1, 0, 1) for dx in (-1, 0, 1))

    # Per-tap boundary-validity masks over the flattened H*W positions.
    # They are static, so build them host-side with numpy and ship once.
    yy, xx = np.meshgrid(np.arange(H), np.arange(W), indexing="ij")
    yy = yy.reshape(-1)
    xx = xx.reshape(-1)
    masks_np = np.stack([
        ((yy + dy >= 0) & (yy + dy < H) & (xx + dx >= 0) & (xx + dx < W))
        for dy, dx in taps]).astype(np.float32).reshape(9, 1, HW)
    masks = jnp.asarray(masks_np)

    # Weights as (Cout, 9*Cin), K ordered (tap, cin) with tap = ky*3 + kx,
    # matching the kernel's tap loop: OIHW -> (O, ky, kx, I) -> (O, 9*I).
    def as_matrix(w):
        co, ci = w.shape[0], w.shape[1]
        return jnp.transpose(w, (0, 2, 3, 1)).reshape(co, 9 * ci).astype(jnp.float32)

    w1m, w2m, w3m = as_matrix(w1), as_matrix(w2), as_matrix(w3)
    b1c = b1.reshape(C1, 1).astype(jnp.float32)
    b2c = b2.reshape(C2, 1).astype(jnp.float32)
    b3c = b3.reshape(C3, 1).astype(jnp.float32)

    # Flatten spatial onto the lane axis (free, contiguous reshape in HBM).
    x_flat = x_nchw.reshape(N, C0, HW)

    roll_like_numpy = _roll_like_numpy()

    def shift_plus(a, off):
        # shifted[..., p] = a[..., (p + off) % HW]; wrapped values get masked.
        if off == 0:
            return a
        amount = (-off) % HW if roll_like_numpy else off % HW
        return pltpu.roll(a, amount, 1)

    def kernel(x_ref, masks_ref, w1_ref, b1_ref, w2_ref, b2_ref,
               w3_ref, b3_ref, o_ref, slab_ref):
        def conv3x3_relu(act, w_ref, b_ref):
            cin = act.shape[0]
            k = 9 * cin
            # im2col: pack the 9 rolled + masked taps into one (9*Cin, H*W)
            # slab so the whole layer is a single large-K MXU matmul.
            for t, (dy, dx) in enumerate(taps):
                shifted = shift_plus(act, dy * W + dx)
                slab_ref[t * cin:(t + 1) * cin, :] = shifted * masks_ref[t]
            out = jnp.dot(w_ref[...], slab_ref[0:k, :],
                          preferred_element_type=jnp.float32)
            out = out + b_ref[...]            # (Cout, 1) broadcast over lanes
            return jnp.maximum(out, 0.0)      # ReLU

        act = x_ref[0].astype(jnp.float32)        # (C0, H*W), lanes = spatial
        act = conv3x3_relu(act, w1_ref, b1_ref)   # (C1, H*W), stays on-chip
        act = conv3x3_relu(act, w2_ref, b2_ref)   # (C2, H*W), stays on-chip
        act = conv3x3_relu(act, w3_ref, b3_ref)   # (C3, H*W)
        o_ref[0] = act.astype(o_ref.dtype)        # lane-dense store

    out_flat = pl.pallas_call(
        kernel,
        out_shape=jax.ShapeDtypeStruct((N, C3, HW), x_nchw.dtype),
        grid=(N,),
        in_specs=[
            pl.BlockSpec((1, C0, HW), lambda n: (n, 0, 0)),
            pl.BlockSpec((9, 1, HW), lambda n: (0, 0, 0)),
            pl.BlockSpec((C1, 9 * C0), lambda n: (0, 0)),
            pl.BlockSpec((C1, 1), lambda n: (0, 0)),
            pl.BlockSpec((C2, 9 * C1), lambda n: (0, 0)),
            pl.BlockSpec((C2, 1), lambda n: (0, 0)),
            pl.BlockSpec((C3, 9 * C2), lambda n: (0, 0)),
            pl.BlockSpec((C3, 1), lambda n: (0, 0)),
        ],
        out_specs=pl.BlockSpec((1, C3, HW), lambda n: (n, 0, 0)),
        scratch_shapes=[pltpu.VMEM((9 * C0, HW), jnp.float32)],
        compiler_params=pltpu.CompilerParams(
            dimension_semantics=("parallel",)),
    )(x_flat, masks, w1m, b1c, w2m, b2c, w3m, b3c)

    return out_flat.reshape(N, C3, H, W)


class VAEEncoderPallas:
    """Deterministic-init re-implementation of VAE_Encoder (3x conv3x3 + ReLU)."""

    def __init__(self, d_model, key):
        c0, c1, c2, c3 = d_model, d_model // 2, d_model // 4, d_model // 8
        self.params = []
        for cin, cout in [(c0, c1), (c1, c2), (c2, c3)]:
            key, kw, kb = jax.random.split(key, 3)
            bound = 1.0 / np.sqrt(cin * 9)
            w = jax.random.uniform(kw, (cout, cin, 3, 3), jnp.float32,
                                   -bound, bound)
            b = jax.random.uniform(kb, (cout,), jnp.float32, -bound, bound)
            self.params.append((w, b))

    def __call__(self, x_nchw):
        return vae_encoder_forward(x_nchw, self.params)


def _reference_forward(x_nchw, params):
    """Pure-JAX (XLA conv) reference for correctness checking."""
    x = x_nchw
    for w, b in params:
        x = lax.conv_general_dilated(
            x, w, window_strides=(1, 1), padding=((1, 1), (1, 1)),
            dimension_numbers=("NCHW", "OIHW", "NCHW"))
        x = jnp.maximum(x + b[None, :, None, None], 0.0)
    return x


if __name__ == "__main__":
    key = jax.random.PRNGKey(0)
    d_model = 16
    N, H, W = 2, 16, 16

    key, kx = jax.random.split(key)
    x = jax.random.normal(kx, (N, d_model, H, W), jnp.float32)  # NCHW, like PyTorch

    enc = VAEEncoderPallas(d_model, key)
    out = jax.block_until_ready(enc(x))

    ref = _reference_forward(x, enc.params)
    assert out.shape == (N, d_model // 8, H, W), out.shape
    np.testing.assert_allclose(np.asarray(out), np.asarray(ref),
                               rtol=1e-3, atol=1e-3)
    print("KERNEL_OK")
</pallas_src>

<mosaic_0001>
module attributes {stable_mosaic.version = 11 : i64} {
  func.func @probe(%arg0: memref<8x128xf32, #tpu.memory_space<vmem>>, %arg1: memref<8x128xf32, #tpu.memory_space<vmem>>) attributes {dimension_semantics = [], scalar_prefetch = 0 : i64, scratch_operands = 0 : i64, tpu.core_type = #tpu.core_type<tc>} {
    %c0 = arith.constant 0 : index
    %c0_0 = arith.constant 0 : index
    %0 = vector.load %arg0[%c0, %c0_0] : memref<8x128xf32, #tpu.memory_space<vmem>>, vector<8x128xf32>
    %c1_i32 = arith.constant 1 : i32
    %1 = tpu.dynamic_rotate %0 by %c1_i32 dim 1 : vector<8x128xf32>, i32 -> vector<8x128xf32>
    %c0_1 = arith.constant 0 : index
    %c0_2 = arith.constant 0 : index
    %2 = vector.load %arg1[%c0_1, %c0_2] : memref<8x128xf32, #tpu.memory_space<vmem>>, vector<8x128xf32>
    tpu.vector_store %arg1[%c0_1, %c0_2], %1 {strides = array<i32>} : memref<8x128xf32, #tpu.memory_space<vmem>>, vector<8x128xf32>,
    return
  }
}

</mosaic_0001>

<llo_original>
// kernel: tpu_custom_call.1
$region0: #{tpu_custom_call.1}
  #allocation0 [shape = 'u32[]', space=smem, size = 0x4, offset = 0x4, fixed_abs, tag = 'smem constant byte address 0x4 - core index']
  #allocation1 [shape = 'u32[144,128]{1,0:T(1,128)}', space=vmem, size = 0x12000, scoped, tag = 'internal scratch']
  %s0 = inlined_call_operand.hbm [shape: f32[8,128], index: 0, kind: input, shape index: {}]
  %s1 = inlined_call_operand.hbm [shape: f32[8,128], index: 1, kind: output, shape index: {}]
  %s2 = sld [smem:[#allocation0]]
  $region18: #{tpu_custom_call.1} parent=0
    _
  %s4 = ssub.s32 1, %s2
  %s5 = scalar_select 0, %s4, %s2
  $region1: #{tpu_custom_call.1} parent=0
    #allocation2 [shape = 'u8[4096]{0}', space=vmem, size = 0x1000, scoped, tag = 'input window, operand 0, single buffered']
    #allocation3 [shape = 's32[1]{0}', space=sflag, size = 0x4, scoped, tag = 'scoped memory for tpu_custom_call.1']
    #allocation4 [shape = 's32[1]{0}', space=sflag, size = 0x4, scoped, tag = 'scoped memory for tpu_custom_call.1']
    #allocation5 [shape = 'u8[4096]{0}', space=vmem, size = 0x1000, scoped, tag = 'output window, operand 0, single buffered']
    %6 = vsyncpa [#allocation3], 0
    %7 = vsyncpa [#allocation4], 0
    // Predicated region
    $region2: #{tpu_custom_call.1} parent=1 // pred_check
      _
    $region3: #{tpu_custom_call.1} parent=1 // pred_check_branch
      %9 = sbr.rel (0) target = $region5
    $region4: #{tpu_custom_call.1} parent=1 // pred_region
      %s11 = ssub.s32 128, 128
      %12 = vsyncadd [#allocation3], %s11
      %s14 = sshll.u32 [#allocation2], 4
      %s15 = int_to_ptr.vmem [resolvable:$true] %s14
      %17 = dma.hbm_to_vmem [thread:$0]  %s0, 128, %s15, [#allocation3]
    $region5: #{tpu_custom_call.1} parent=1 // pred_fallthru
      _
    // Predicated region
    $region6: #{tpu_custom_call.1} parent=1 // pred_check
      _
    $region7: #{tpu_custom_call.1} parent=1 // pred_check_branch
      %19 = sbr.rel (0) target = $region9
    $region8: #{tpu_custom_call.1} parent=1 // pred_region
      %20 = dma.done [#allocation3], 128
    $region9: #{tpu_custom_call.1} parent=1 // pred_fallthru
      _
    %v21 = vld [vmem:[#allocation2] sm:$0xff]
    %22 = vrot.lane.b32.xlu0 %v21, 1
    %v23 = vpop.permute.xlu0 %22
    %24 = vst [vmem:[#allocation5] sm:$0xff] %v23
    // Predicated region
    $region10: #{tpu_custom_call.1} parent=1 // pred_check
      _
    $region11: #{tpu_custom_call.1} parent=1 // pred_check_branch
      %26 = sbr.rel (0) target = $region13
    $region12: #{tpu_custom_call.1} parent=1 // pred_region
      %s28 = ssub.s32 128, 128
      %29 = vsyncadd [#allocation4], %s28
      %s31 = sshll.u32 [#allocation5], 4
      %s32 = int_to_ptr.vmem [resolvable:$true] %s31
      %34 = dma.vmem_to_hbm [thread:$0]  %s32, 128, %s1, [#allocation4]
    $region13: #{tpu_custom_call.1} parent=1 // pred_fallthru
      _
    // Predicated region
    $region14: #{tpu_custom_call.1} parent=1 // pred_check
      _
    $region15: #{tpu_custom_call.1} parent=1 // pred_check_branch
      %36 = sbr.rel (0) target = $region17
    $region16: #{tpu_custom_call.1} parent=1 // pred_region
      %37 = dma.done [#allocation4], 128
    $region17: #{tpu_custom_call.1} parent=1 // pred_fallthru
      _
    %38 = vsyncpa [#allocation3], 1
    %39 = vsyncpa [#allocation4], 1

</llo_original>
